<compile_context>
chip_gen: v5e
topology: v5e:2x2
jax: 0.10.0
libtpu: 0.0.40
codegen_flags: <defaults>
</compile_context>

<pallas_src>
import functools

import jax
import jax.numpy as jnp
from jax.experimental import pallas as pl
from jax.experimental.pallas import tpu as pltpu


def _round_up(v, m):
    return ((v + m - 1) // m) * m


def _vmem_block_bytes(shape, dtype):
    """Rough VMEM footprint of one block after (sublane, lane) tile padding."""
    itemsize = jnp.dtype(dtype).itemsize
    s = list(shape)
    if len(s) >= 1:
        s[-1] = _round_up(s[-1], 128)
    if len(s) >= 2:
        s[-2] = _round_up(s[-2], 8 * (4 // itemsize))
    total = itemsize
    for d in s:
        total *= d
    return total


def _conv_bn_relu_kernel(x_ref, w_ref, scale_ref, bias_ref, o_ref, patch_ref, *,
                         tile_rows, out_w, kh, kw_cin, sub_m):
    # x_ref:     (1, Hin_pad, Wo, KW*Cin) bf16, KW*Cin packed into lanes; full
    #            padded image, resident per batch (revisited across row tiles).
    # w_ref:     (KH*KW*Cin, Cout_pad)    bf16 conv weights (BN NOT folded in).
    # scale_ref: (1, Cout_pad)            f32 per-channel BN scale.
    # bias_ref:  (1, Cout_pad)            f32 per-channel BN bias.
    # o_ref:     (1, TM, Cout_pad)        bf16, TM = tile_rows * Wo.
    # patch_ref: (TM, KH*KW*Cin)          bf16 VMEM scratch (patch matrix).
    r = pl.program_id(1)
    row0 = pl.multiple_of(r * tile_rows, tile_rows)
    tm = tile_rows * out_w

    # (1) Assemble the (TM, K) patch matrix once per grid step: only KH copies,
    #     each a shift-free row slice (dx shifts were pre-packed into lanes).
    for dy in range(kh):
        rows = x_ref[0, pl.ds(row0 + dy, tile_rows), :, :]   # (tile_rows, Wo, KW*Cin)
        patch_ref[:, dy * kw_cin:(dy + 1) * kw_cin] = rows.reshape(tm, kw_cin)

    w = w_ref[...]            # resident bf16 weights (K, Cout_pad)
    scale = scale_ref[...]    # f32 epilogue constants, hoisted out of the loop
    bias = bias_ref[...]

    # (2) One fused-K MXU matmul per M sub-tile; the f32 result tile stays live
    #     only through the scale/bias/ReLU epilogue and the bf16 store.
    for m0 in range(0, tm, sub_m):
        m = min(sub_m, tm - m0)
        acc = jnp.dot(patch_ref[m0:m0 + m, :], w,
                      preferred_element_type=jnp.float32)
        y = jnp.maximum(acc * scale + bias, 0.0)
        o_ref[0, m0:m0 + m, :] = y.astype(o_ref.dtype)


def basic_conv2d(x_nchw, weight, gamma, beta, running_mean, running_var, *,
                 eps=1e-3, padding=1, tile_rows=None):
    """Conv2d(bias=False, stride=1, padding=padding) + BatchNorm2d(eval) + ReLU."""
    # TODO(synk): stride != 1 and asymmetric padding are not implemented.
    n, cin, h, w = x_nchw.shape
    cout, cin_w, kh, kw = weight.shape
    assert cin == cin_w
    p = padding
    ho = h + 2 * p - kh + 1
    wo = w + 2 * p - kw + 1
    assert ho > 0 and wo > 0

    # Row tile: ~512 output positions per grid step; keep tm a multiple of 16
    # (dense bf16 output stores).  Tail rows handled by padding + final slice.
    if tile_rows is None:
        tile_rows = max(1, min(ho, 512 // max(wo, 1)))
    tile_rows = min(tile_rows, ho)
    while (tile_rows * wo) % 16 != 0 and tile_rows < ho:
        tile_rows += 1
    rt = pl.cdiv(ho, tile_rows)
    ho_pad = rt * tile_rows
    tm = tile_rows * wo
    sub_m = min(128, tm)                     # register-blocked epilogue sub-tile

    kw_cin = kw * cin
    k_dim = kh * kw_cin
    # Cout padded to a lane-dense multiple of 128 (dense vst, MXU-friendly N).
    # For tiny Cout this costs write amplification; real Inception branches use
    # Cout >= 64 where the padding is cheap.
    cout_pad = _round_up(cout, 128)

    # ---- glue (plain JAX): layout, spatial pad, KW*Cin lane packing, bf16 ----
    # TODO(synk): keep activations NHWC/bf16 between layers in a real model so
    # this transpose/cast pre-pass and the NHWC->NCHW post-pass disappear.
    x_nhwc = jnp.transpose(x_nchw, (0, 2, 3, 1)).astype(jnp.bfloat16)
    hin_pad = ho_pad + kh - 1
    pad_bottom = hin_pad - h - p
    pad_right = (wo + kw - 1) - w - p
    x_sp = jnp.pad(x_nhwc, ((0, 0), (p, pad_bottom), (p, pad_right), (0, 0)))
    # Pack KW*Cin into the last (lane) dim: x_packed[n, y, x, dx*cin + c].
    x_packed = jnp.concatenate([x_sp[:, :, dx:dx + wo, :] for dx in range(kw)],
                               axis=-1)                 # (n, hin_pad, wo, kw*cin)

    # Weights -> (KH*KW*Cin, Cout_pad); row ordering (dy, dx, c) matches patch.
    w_mat = jnp.transpose(weight, (2, 3, 1, 0)).reshape(k_dim, cout)
    w_mat = jnp.pad(w_mat, ((0, 0), (0, cout_pad - cout))).astype(jnp.bfloat16)

    # BN (eval mode) as f32 per-channel scale/bias, applied in the epilogue.
    scale = gamma / jnp.sqrt(running_var + eps)
    bias = beta - running_mean * scale
    scale_pad = jnp.pad(scale, (0, cout_pad - cout)).reshape(1, cout_pad)
    scale_pad = scale_pad.astype(jnp.float32)
    bias_pad = jnp.pad(bias, (0, cout_pad - cout)).reshape(1, cout_pad)
    bias_pad = bias_pad.astype(jnp.float32)

    kernel = functools.partial(_conv_bn_relu_kernel, tile_rows=tile_rows,
                               out_w=wo, kh=kh, kw_cin=kw_cin, sub_m=sub_m)

    # VMEM budget: double-buffered image/weights/epilogue/output blocks plus
    # the patch scratch and one f32 result tile, with generous headroom.
    est = (2 * _vmem_block_bytes((1, hin_pad, wo, kw_cin), jnp.bfloat16)
           + 2 * _vmem_block_bytes((k_dim, cout_pad), jnp.bfloat16)
           + 4 * _vmem_block_bytes((1, cout_pad), jnp.float32)
           + 2 * _vmem_block_bytes((1, tm, cout_pad), jnp.bfloat16)
           + _vmem_block_bytes((tm, k_dim), jnp.bfloat16)
           + _vmem_block_bytes((sub_m, cout_pad), jnp.float32))
    vmem_limit = int(min(max(2 * est + (8 << 20), 32 << 20), 100 << 20))

    # TODO(synk): on v7x (64 MiB VMEM) halo-tile the input rows (manual
    # pltpu.make_async_copy or pl.Element row indexing) instead of keeping the
    # whole padded image resident; here it is only revisited across row tiles.
    out3d = pl.pallas_call(
        kernel,
        out_shape=jax.ShapeDtypeStruct((n * rt, tm, cout_pad), jnp.bfloat16),
        grid_spec=pltpu.PrefetchScalarGridSpec(
            num_scalar_prefetch=0,
            grid=(n, rt),
            in_specs=[
                # Full packed image per batch element; re-DMA'd only when the
                # batch index changes.
                pl.BlockSpec((1, hin_pad, wo, kw_cin), lambda b, r: (b, 0, 0, 0)),
                # Weights + BN scale/bias: resident across the whole grid.
                pl.BlockSpec((k_dim, cout_pad), lambda b, r: (0, 0)),
                pl.BlockSpec((1, cout_pad), lambda b, r: (0, 0)),
                pl.BlockSpec((1, cout_pad), lambda b, r: (0, 0)),
            ],
            out_specs=pl.BlockSpec((1, tm, cout_pad),
                                   lambda b, r: (b * rt + r, 0, 0)),
            scratch_shapes=[pltpu.VMEM((tm, k_dim), jnp.bfloat16)],
        ),
        compiler_params=pltpu.CompilerParams(
            dimension_semantics=("parallel", "parallel"),
            vmem_limit_bytes=vmem_limit),
    )(x_packed, w_mat, scale_pad, bias_pad)

    out = out3d.reshape(n, ho_pad, wo, cout_pad)[:, :ho, :, :cout]
    return jnp.transpose(out, (0, 3, 1, 2)).astype(x_nchw.dtype)   # NHWC -> NCHW


if __name__ == "__main__":
    # small shapes consistent with the module
    N, CIN, H, W = 2, 4, 16, 16
    COUT, KH, KW = 8, 3, 3

    key = jax.random.PRNGKey(0)
    kx, kw_, kg, kb, km, kv = jax.random.split(key, 6)

    x = jax.random.normal(kx, (N, CIN, H, W), dtype=jnp.float32)
    weight = jax.random.normal(kw_, (COUT, CIN, KH, KW), dtype=jnp.float32) * 0.1
    gamma = 1.0 + 0.1 * jax.random.normal(kg, (COUT,), dtype=jnp.float32)
    beta = 0.1 * jax.random.normal(kb, (COUT,), dtype=jnp.float32)
    running_mean = 0.1 * jax.random.normal(km, (COUT,), dtype=jnp.float32)
    running_var = jnp.abs(jax.random.normal(kv, (COUT,), dtype=jnp.float32)) + 0.5

    fn = jax.jit(functools.partial(basic_conv2d, eps=1e-3, padding=1))
    out = fn(x, weight, gamma, beta, running_mean, running_var)
    jax.block_until_ready(out)

    # Reference built from the same bf16-rounded conv operands (the kernel uses
    # bf16 MXU inputs, f32 accumulation, f32 BN epilogue, then stores bf16).
    scale = gamma / jnp.sqrt(running_var + 1e-3)
    bias = beta - running_mean * scale
    x_bf = x.astype(jnp.bfloat16).astype(jnp.float32)
    w_bf = weight.astype(jnp.bfloat16).astype(jnp.float32)
    conv = jax.lax.conv_general_dilated(
        x_bf, w_bf, window_strides=(1, 1), padding=((1, 1), (1, 1)),
        dimension_numbers=("NCHW", "OIHW", "NCHW"))
    ref = jnp.maximum(conv * scale.reshape(1, COUT, 1, 1)
                      + bias.reshape(1, COUT, 1, 1), 0.0)
    ref = ref.astype(jnp.bfloat16).astype(jnp.float32)

    assert out.shape == (N, COUT, H, W)
    max_err = float(jnp.max(jnp.abs(out - ref)))
    assert jnp.allclose(out, ref, atol=2e-2, rtol=2e-2), max_err

    print("KERNEL_OK")
</pallas_src>

<mosaic_0001>
module attributes {stable_mosaic.version = 11 : i64} {
  func.func @_conv_bn_relu_kernel(%arg0: i32, %arg1: i32, %arg2: memref<1x18x16x12xbf16, #tpu.memory_space<vmem>>, %arg3: memref<36x128xbf16, #tpu.memory_space<vmem>>, %arg4: memref<1x128xf32, #tpu.memory_space<vmem>>, %arg5: memref<1x128xf32, #tpu.memory_space<vmem>>, %arg6: memref<1x256x128xbf16, #tpu.memory_space<vmem>>, %arg7: memref<256x36xbf16, #tpu.memory_space<vmem>>) attributes {dimension_semantics = [#tpu.dimension_semantics<parallel>, #tpu.dimension_semantics<parallel>], iteration_bounds = array<i64: 2, 1>, scalar_prefetch = 0 : i64, scratch_operands = 1 : i64, tpu.core_type = #tpu.core_type<tc>, window_params = [{transform_indices = @transform_0, window_bounds = array<i64: 1, 18, 16, 12>}, {pipeline_mode = #tpu.pipeline_mode<synchronous>, transform_indices = @transform_1, window_bounds = array<i64: 36, 128>}, {pipeline_mode = #tpu.pipeline_mode<synchronous>, transform_indices = @transform_2, window_bounds = array<i64: 1, 128>}, {pipeline_mode = #tpu.pipeline_mode<synchronous>, transform_indices = @transform_3, window_bounds = array<i64: 1, 128>}, {transform_indices = @transform_4, window_bounds = array<i64: 1, 256, 128>}]} {
    %c16_i32 = arith.constant 16 : i32
    %0 = arith.muli %arg1, %c16_i32 : i32
    %1 = tpu.assume_multiple %0, 16 : i32
    %c0_i32 = arith.constant 0 : i32
    %2 = arith.addi %1, %c0_i32 : i32
    %c0 = arith.constant 0 : index
    %3 = arith.index_cast %2 : i32 to index
    %c0_0 = arith.constant 0 : index
    %c0_1 = arith.constant 0 : index
    %4 = vector.load %arg2[%c0, %3, %c0_0, %c0_1] : memref<1x18x16x12xbf16, #tpu.memory_space<vmem>>, vector<1x16x16x12xbf16>
    %5 = vector.shape_cast %4 : vector<1x16x16x12xbf16> to vector<16x16x12xbf16>
    %6 = vector.shape_cast %5 : vector<16x16x12xbf16> to vector<256x12xbf16>
    %c0_2 = arith.constant 0 : index
    %c0_3 = arith.constant 0 : index
    %7 = vector.load %arg7[%c0_2, %c0_3] : memref<256x36xbf16, #tpu.memory_space<vmem>>, vector<256x12xbf16>
    tpu.vector_store %arg7[%c0_2, %c0_3], %6 {strides = array<i32>} : memref<256x36xbf16, #tpu.memory_space<vmem>>, vector<256x12xbf16>,
    %c1_i32 = arith.constant 1 : i32
    %8 = arith.addi %1, %c1_i32 : i32
    %c0_4 = arith.constant 0 : index
    %9 = arith.index_cast %8 : i32 to index
    %c0_5 = arith.constant 0 : index
    %c0_6 = arith.constant 0 : index
    %10 = vector.load %arg2[%c0_4, %9, %c0_5, %c0_6] : memref<1x18x16x12xbf16, #tpu.memory_space<vmem>>, vector<1x16x16x12xbf16>
    %11 = vector.shape_cast %10 : vector<1x16x16x12xbf16> to vector<16x16x12xbf16>
    %12 = vector.shape_cast %11 : vector<16x16x12xbf16> to vector<256x12xbf16>
    %c0_7 = arith.constant 0 : index
    %c12 = arith.constant 12 : index
    %13 = vector.load %arg7[%c0_7, %c12] : memref<256x36xbf16, #tpu.memory_space<vmem>>, vector<256x12xbf16>
    tpu.vector_store %arg7[%c0_7, %c12], %12 {strides = array<i32>} : memref<256x36xbf16, #tpu.memory_space<vmem>>, vector<256x12xbf16>,
    %c2_i32 = arith.constant 2 : i32
    %14 = arith.addi %1, %c2_i32 : i32
    %c0_8 = arith.constant 0 : index
    %15 = arith.index_cast %14 : i32 to index
    %c0_9 = arith.constant 0 : index
    %c0_10 = arith.constant 0 : index
    %16 = vector.load %arg2[%c0_8, %15, %c0_9, %c0_10] : memref<1x18x16x12xbf16, #tpu.memory_space<vmem>>, vector<1x16x16x12xbf16>
    %17 = vector.shape_cast %16 : vector<1x16x16x12xbf16> to vector<16x16x12xbf16>
    %18 = vector.shape_cast %17 : vector<16x16x12xbf16> to vector<256x12xbf16>
    %c0_11 = arith.constant 0 : index
    %c24 = arith.constant 24 : index
    %19 = vector.load %arg7[%c0_11, %c24] : memref<256x36xbf16, #tpu.memory_space<vmem>>, vector<256x12xbf16>
    tpu.vector_store %arg7[%c0_11, %c24], %18 {strides = array<i32>} : memref<256x36xbf16, #tpu.memory_space<vmem>>, vector<256x12xbf16>,
    %c0_12 = arith.constant 0 : index
    %c0_13 = arith.constant 0 : index
    %20 = vector.load %arg3[%c0_12, %c0_13] : memref<36x128xbf16, #tpu.memory_space<vmem>>, vector<36x128xbf16>
    %c0_14 = arith.constant 0 : index
    %c0_15 = arith.constant 0 : index
    %21 = vector.load %arg4[%c0_14, %c0_15] : memref<1x128xf32, #tpu.memory_space<vmem>>, vector<1x128xf32>
    %c0_16 = arith.constant 0 : index
    %c0_17 = arith.constant 0 : index
    %22 = vector.load %arg5[%c0_16, %c0_17] : memref<1x128xf32, #tpu.memory_space<vmem>>, vector<1x128xf32>
    %c0_18 = arith.constant 0 : index
    %c0_19 = arith.constant 0 : index
    %23 = vector.load %arg7[%c0_18, %c0_19] : memref<256x36xbf16, #tpu.memory_space<vmem>>, vector<128x36xbf16>
    %cst = arith.constant dense<0.000000e+00> : vector<128x128xf32>
    %24 = tpu.matmul %23, %20, %cst {dimension_numbers = #tpu.dot_dimension_numbers<[1], [0], [0], [1], [0, 0, 1, 1], [], []>} : vector<128x36xbf16>, vector<36x128xbf16>, vector<128x128xf32> -> vector<128x128xf32>
    %25 = vector.broadcast %21 : vector<1x128xf32> to vector<128x128xf32>
    %26 = arith.mulf %24, %25 : vector<128x128xf32>
    %27 = vector.broadcast %22 : vector<1x128xf32> to vector<128x128xf32>
    %28 = arith.addf %26, %27 : vector<128x128xf32>
    %cst_20 = arith.constant 0.000000e+00 : f32
    %29 = vector.broadcast %cst_20 : f32 to vector<128x128xf32>
    %30 = arith.maximumf %28, %29 : vector<128x128xf32>
    %31 = arith.truncf %30 : vector<128x128xf32> to vector<128x128xbf16>
    %c0_21 = arith.constant 0 : index
    %c0_22 = arith.constant 0 : index
    %c0_23 = arith.constant 0 : index
    %32 = vector.load %arg6[%c0_21, %c0_22, %c0_23] : memref<1x256x128xbf16, #tpu.memory_space<vmem>>, vector<1x128x128xbf16>
    %33 = vector.shape_cast %32 : vector<1x128x128xbf16> to vector<128x128xbf16>
    %34 = vector.shape_cast %31 : vector<128x128xbf16> to vector<1x128x128xbf16>
    tpu.vector_store %arg6[%c0_21, %c0_22, %c0_23], %34 {strides = array<i32>} : memref<1x256x128xbf16, #tpu.memory_space<vmem>>, vector<1x128x128xbf16>,
    %c128 = arith.constant 128 : index
    %c0_24 = arith.constant 0 : index
    %35 = vector.load %arg7[%c128, %c0_24] : memref<256x36xbf16, #tpu.memory_space<vmem>>, vector<128x36xbf16>
    %cst_25 = arith.constant dense<0.000000e+00> : vector<128x128xf32>
    %36 = tpu.matmul %35, %20, %cst_25 {dimension_numbers = #tpu.dot_dimension_numbers<[1], [0], [0], [1], [0, 0, 1, 1], [], []>} : vector<128x36xbf16>, vector<36x128xbf16>, vector<128x128xf32> -> vector<128x128xf32>
    %37 = vector.broadcast %21 : vector<1x128xf32> to vector<128x128xf32>
    %38 = arith.mulf %36, %37 : vector<128x128xf32>
    %39 = vector.broadcast %22 : vector<1x128xf32> to vector<128x128xf32>
    %40 = arith.addf %38, %39 : vector<128x128xf32>
    %cst_26 = arith.constant 0.000000e+00 : f32
    %41 = vector.broadcast %cst_26 : f32 to vector<128x128xf32>
    %42 = arith.maximumf %40, %41 : vector<128x128xf32>
    %43 = arith.truncf %42 : vector<128x128xf32> to vector<128x128xbf16>
    %c0_27 = arith.constant 0 : index
    %c128_28 = arith.constant 128 : index
    %c0_29 = arith.constant 0 : index
    %44 = vector.load %arg6[%c0_27, %c128_28, %c0_29] : memref<1x256x128xbf16, #tpu.memory_space<vmem>>, vector<1x128x128xbf16>
    %45 = vector.shape_cast %44 : vector<1x128x128xbf16> to vector<128x128xbf16>
    %46 = vector.shape_cast %43 : vector<128x128xbf16> to vector<1x128x128xbf16>
    tpu.vector_store %arg6[%c0_27, %c128_28, %c0_29], %46 {strides = array<i32>} : memref<1x256x128xbf16, #tpu.memory_space<vmem>>, vector<1x128x128xbf16>,
    return
  }
  func.func @transform_0(%arg0: i32, %arg1: i32) -> (i32, i32, i32, i32) {
    %c0_i32 = arith.constant 0 : i32
    %c0_i32_0 = arith.constant 0 : i32
    %c0_i32_1 = arith.constant 0 : i32
    %c0_i32_2 = arith.constant 0 : i32
    return %arg0, %c0_i32, %c0_i32_0, %c0_i32_1 : i32, i32, i32, i32
  }
  func.func @transform_1(%arg0: i32, %arg1: i32) -> (i32, i32) {
    %c0_i32 = arith.constant 0 : i32
    %c0_i32_0 = arith.constant 0 : i32
    %c0_i32_1 = arith.constant 0 : i32
    return %c0_i32, %c0_i32_0 : i32, i32
  }
  func.func @transform_2(%arg0: i32, %arg1: i32) -> (i32, i32) {
    %c0_i32 = arith.constant 0 : i32
    %c0_i32_0 = arith.constant 0 : i32
    %c0_i32_1 = arith.constant 0 : i32
    return %c0_i32, %c0_i32_0 : i32, i32
  }
  func.func @transform_3(%arg0: i32, %arg1: i32) -> (i32, i32) {
    %c0_i32 = arith.constant 0 : i32
    %c0_i32_0 = arith.constant 0 : i32
    %c0_i32_1 = arith.constant 0 : i32
    return %c0_i32, %c0_i32_0 : i32, i32
  }
  func.func @transform_4(%arg0: i32, %arg1: i32) -> (i32, i32, i32) {
    %c1_i32 = arith.constant 1 : i32
    %0 = arith.muli %arg0, %c1_i32 : i32
    %1 = arith.addi %0, %arg1 : i32
    %c0_i32 = arith.constant 0 : i32
    %c0_i32_0 = arith.constant 0 : i32
    %c0_i32_1 = arith.constant 0 : i32
    return %1, %c0_i32, %c0_i32_0 : i32, i32, i32
  }
}

</mosaic_0001>

<llo_original>
// kernel: basic_conv2d.1
$region0: #{basic_conv2d.1}
  #allocation0 [shape = 'u32[]', space=smem, size = 0x4, offset = 0x4, fixed_abs, tag = 'smem constant byte address 0x4 - core index']
  #allocation1 [shape = 'u32[72,128]{1,0:T(1,128)}', space=vmem, size = 0x9000, scoped, tag = 'internal scratch']
  #allocation2 [shape = 'bf16[256,36]{1,0:T(8,128)(2,1)}', space=vmem, size = 0x10000, scoped, tag = 'scratch operand']
  %s0 = inlined_call_operand.vmem [shape: bf16[2,18,16,12], index: 0, kind: input, shape index: {}]
  %s1 = inlined_call_operand.vmem [shape: bf16[36,128], index: 1, kind: input, shape index: {}]
  %s2 = inlined_call_operand.vmem [shape: f32[1,128], index: 2, kind: input, shape index: {}]
  %s3 = inlined_call_operand.vmem [shape: f32[1,128], index: 3, kind: input, shape index: {}]
  %s4 = inlined_call_operand.vmem [shape: bf16[2,256,128], index: 4, kind: output, shape index: {}]
  %s5 = sld [smem:[#allocation0]]
  $region49: #{basic_conv2d.1} parent=0
    _
  %s7 = ssub.s32 1, %s5
  %s8 = scalar_select 0, %s7, %s5
  loop: start=0, step=1, limit=4
  $region2: #{basic_conv2d.1} parent=0 // loop_pre_header
    _
  $region3: #{basic_conv2d.1} parent=0 // loop_header
    %s10 = sphi 0, %s14
    %p11 = scmp.ge.s32.totalorder %s10, 4
    %s17 = sphi 0, %s29
    %s18 = sphi 0, %s25
    %s19 = sphi 0, %s17
    %s20 = sphi 0, %s18
    %s21 = sphi 0, %s19
    %s22 = sphi 0, %s20
    %s32 = sphi 0, %s34
    %s35 = sphi 0, %s32
    %s36 = sphi 0, %s35
    %s52 = sphi 0, %s36
    %s56 = sphi 0, %s56
    %s58 = sphi 0, %s56
    %s59 = sphi 0, %s58
    %s73 = sphi 0, %s59
    %s77 = sphi 0, %s77
    %s79 = sphi 0, %s77
    %s80 = sphi 0, %s79
    %s94 = sphi 0, %s80
    %s98 = sphi 0, %s98
    %s100 = sphi 0, %s98
    %s101 = sphi 0, %s100
    %s115 = sphi 0, %s101
    %s123 = sphi 0, %s125
    %s126 = sphi 0, %s123
    %s127 = sphi 0, %s126
    %s143 = sphi 0, %s127
  $region4: #{basic_conv2d.1} parent=0 // loop_header_branch
    %13 = sbr.rel (%p11) target = $region8
  $region5: #{basic_conv2d.1} parent=0 // loop_body
    %s15 = ssub.s32 %s10, 1
    %s16 = ssub.s32 %s10, 2
    %s23 = sadd.s32 1, %s18
    %p24 = scmp.ge.s32.totalorder %s23, 1
    %s25 = scalar_select %p24, 0, %s23
    %s26 = sadd.s32 1, %s17
    %s27 = scalar_select %p24, %s26, %s17
    %p28 = scmp.ge.s32.totalorder %s27, 2
    %s29 = scalar_select %p28, 0, %s27
    %s30 = ssub.s32 %s17, %s29
    %p31 = scmp.eq.s32.totalorder %s30, 0
    %s33 = sadd.s32 %s32, 1
    %s34 = scalar_select %p31, %s32, %s33
    %p37 = pneg %p31
    %p38 = scmp.eq.s32.totalorder %s10, 1
    %p39 = por %p37, %p38
    %p40 = scmp.ne.s32.totalorder %s32, %s35
    %p41 = scmp.eq.s32.totalorder %s10, 0
    %p42 = por %p40, %p41
    %p43 = scmp.ne.s32.totalorder %s32, %s35
    %p44 = scmp.eq.s32.totalorder %s15, 1
    %p45 = por %p43, %p44
    %p46 = scmp.ne.s32.totalorder %s35, %s36
    %p47 = scmp.eq.s32.totalorder %s15, 0
    %p48 = por %p46, %p47
    %p49 = scmp.ne.s32.totalorder %s35, %s36
    %p50 = scmp.eq.s32.totalorder %s16, 1
    %p51 = por %p49, %p50
    %p53 = scmp.ne.s32.totalorder %s36, %s52
    %p54 = scmp.eq.s32.totalorder %s16, 0
    %p55 = por %p53, %p54
    %s57 = sadd.s32 %s56, 1
    %p60 = scmp.eq.s32.totalorder %s10, 1
    %p61 = scmp.ne.s32.totalorder %s56, %s58
    %p62 = scmp.eq.s32.totalorder %s10, 0
    %p63 = por %p61, %p62
    %p64 = scmp.ne.s32.totalorder %s56, %s58
    %p65 = scmp.eq.s32.totalorder %s15, 1
    %p66 = por %p64, %p65
    %p67 = scmp.ne.s32.totalorder %s58, %s59
    %p68 = scmp.eq.s32.totalorder %s15, 0
    %p69 = por %p67, %p68
    %p70 = scmp.ne.s32.totalorder %s58, %s59
    %p71 = scmp.eq.s32.totalorder %s16, 1
    %p72 = por %p70, %p71
    %p74 = scmp.ne.s32.totalorder %s59, %s73
    %p75 = scmp.eq.s32.totalorder %s16, 0
    %p76 = por %p74, %p75
    %s78 = sadd.s32 %s77, 1
    %p81 = scmp.eq.s32.totalorder %s10, 1
    %p82 = scmp.ne.s32.totalorder %s77, %s79
    %p83 = scmp.eq.s32.totalorder %s10, 0
    %p84 = por %p82, %p83
    %p85 = scmp.ne.s32.totalorder %s77, %s79
    %p86 = scmp.eq.s32.totalorder %s15, 1
    %p87 = por %p85, %p86
    %p88 = scmp.ne.s32.totalorder %s79, %s80
    %p89 = scmp.eq.s32.totalorder %s15, 0
    %p90 = por %p88, %p89
    %p91 = scmp.ne.s32.totalorder %s79, %s80
    %p92 = scmp.eq.s32.totalorder %s16, 1
    %p93 = por %p91, %p92
    %p95 = scmp.ne.s32.totalorder %s80, %s94
    %p96 = scmp.eq.s32.totalorder %s16, 0
    %p97 = por %p95, %p96
    %s99 = sadd.s32 %s98, 1
    %p102 = scmp.eq.s32.totalorder %s10, 1
    %p103 = scmp.ne.s32.totalorder %s98, %s100
    %p104 = scmp.eq.s32.totalorder %s10, 0
    %p105 = por %p103, %p104
    %p106 = scmp.ne.s32.totalorder %s98, %s100
    %p107 = scmp.eq.s32.totalorder %s15, 1
    %p108 = por %p106, %p107
    %p109 = scmp.ne.s32.totalorder %s100, %s101
    %p110 = scmp.eq.s32.totalorder %s15, 0
    %p111 = por %p109, %p110
    %p112 = scmp.ne.s32.totalorder %s100, %s101
    %p113 = scmp.eq.s32.totalorder %s16, 1
    %p114 = por %p112, %p113
    %p116 = scmp.ne.s32.totalorder %s101, %s115
    %p117 = scmp.eq.s32.totalorder %s16, 0
    %p118 = por %p116, %p117
    %s119 = sadd.s32 %s17, %s18
    %s120 = sadd.s32 %s29, %s25
    %s121 = ssub.s32 %s119, %s120
    %p122 = scmp.eq.s32.totalorder %s121, 0
    %s124 = sadd.s32 %s123, 1
    %s125 = scalar_select %p122, %s123, %s124
    %p128 = pneg %p122
    %p129 = scmp.eq.s32.totalorder %s10, 1
    %p130 = por %p128, %p129
    %p131 = scmp.ne.s32.totalorder %s123, %s126
    %p132 = scmp.eq.s32.totalorder %s10, 0
    %p133 = por %p131, %p132
    %p134 = scmp.ne.s32.totalorder %s123, %s126
    %p135 = scmp.eq.s32.totalorder %s15, 1
    %p136 = por %p134, %p135
    %p137 = scmp.ne.s32.totalorder %s126, %s127
    %p138 = scmp.eq.s32.totalorder %s15, 0
    %p139 = por %p137, %p138
    %p140 = scmp.ne.s32.totalorder %s126, %s127
    %p141 = scmp.eq.s32.totalorder %s16, 1
    %p142 = por %p140, %p141
    %p144 = scmp.ne.s32.totalorder %s127, %s143
    %p145 = scmp.eq.s32.totalorder %s16, 0
    %p146 = por %p144, %p145
    %p147 = scmp.le.s32.totalorder 1, %s10
    %p148 = scmp.lt.s32.totalorder %s10, 3
    %p149 = pnand %p147, %p148
    %p150 = pneg %p149
    // Predicated region
    $region9: #{basic_conv2d.1} parent=5 // pred_check
      _
    $region10: #{basic_conv2d.1} parent=5 // pred_check_branch
      %152 = sbr.rel (%p149) target = $region12
    $region11: #{basic_conv2d.1} parent=5 // pred_region
      %s153 = ssub.s32 %s10, 1
      // Predicated region
      $region13: #{basic_conv2d.1} parent=11 // pred_check
        %p154 = pneg %p69
      $region14: #{basic_conv2d.1} parent=11 // pred_check_branch
        %156 = sbr.rel (%p154) target = $region16
      $region15: #{basic_conv2d.1} parent=11 // pred_region
        _
      $region16: #{basic_conv2d.1} parent=11 // pred_fallthru
        _
      // Predicated region
      $region17: #{basic_conv2d.1} parent=11 // pred_check
        %p157 = pneg %p90
      $region18: #{basic_conv2d.1} parent=11 // pred_check_branch
        %159 = sbr.rel (%p157) target = $region20
      $region19: #{basic_conv2d.1} parent=11 // pred_region
        _
      $region20: #{basic_conv2d.1} parent=11 // pred_fallthru
        _
      // Predicated region
      $region21: #{basic_conv2d.1} parent=11 // pred_check
        %p160 = pneg %p111
      $region22: #{basic_conv2d.1} parent=11 // pred_check_branch
        %162 = sbr.rel (%p160) target = $region24
      $region23: #{basic_conv2d.1} parent=11 // pred_region
        _
      $region24: #{basic_conv2d.1} parent=11 // pred_fallthru
        _
    $region12: #{basic_conv2d.1} parent=5 // pred_fallthru
      _
    %p163 = scmp.lt.s32.totalorder %s10, 2
    // Predicated region
    $region25: #{basic_conv2d.1} parent=5 // pred_check
      %p164 = pneg %p163
    $region26: #{basic_conv2d.1} parent=5 // pred_check_branch
      %166 = sbr.rel (%p164) target = $region28
    $region27: #{basic_conv2d.1} parent=5 // pred_region
      // Predicated region
      $region29: #{basic_conv2d.1} parent=27 // pred_check
        %p167 = pneg %p42
      $region30: #{basic_conv2d.1} parent=27 // pred_check_branch
        %169 = sbr.rel (%p167) target = $region32
      $region31: #{basic_conv2d.1} parent=27 // pred_region
        %p170 = scmp.lt.s32.totalorder %s17, 1
        %s171 = scalar_select %p170, %s17, 1
        %s172 = smul.addr %s171, 36
        %s173 = smul.addr %s172, 4
        %s174 = scalar_lea.vmem %s0, %s173
      $region32: #{basic_conv2d.1} parent=27 // pred_fallthru
        _
    $region28: #{basic_conv2d.1} parent=5 // pred_fallthru
      _
    %p175 = scmp.le.s32.totalorder 1, %s10
    %p176 = scmp.lt.s32.totalorder %s10, 3
    %p177 = pnand %p175, %p176
    %p178 = pneg %p177
    // Predicated region
    $region33: #{basic_conv2d.1} parent=5 // pred_check
      _
    $region34: #{basic_conv2d.1} parent=5 // pred_check_branch
      %180 = sbr.rel (%p177) target = $region36
    $region35: #{basic_conv2d.1} parent=5 // pred_region
      %s181 = ssub.s32 %s10, 1
      %p182 = scmp.lt.s32.totalorder %s19, 1
      %s183 = scalar_select %p182, %s19, 1
      %s184 = smul.addr %s183, 36
      %s185 = smul.addr %s184, 4
      %s186 = scalar_lea.vmem %s0, %s185
      %p187 = pneg %p48
      %p188 = pneg %p45
      %p189 = pneg %p69
      %p190 = pneg %p66
      %p191 = pneg %p90
      %p192 = pneg %p87
      %p193 = pneg %p111
      %p194 = pneg %p108
      %p195 = pneg %p139
      %p196 = pneg %p136
      %s197 = sadd.s32 %s19, %s20
      %p198 = scmp.lt.s32.totalorder %s197, 1
      %s199 = scalar_select %p198, %s197, 1
      %s200 = smul.addr %s199, 32
      %s201 = smul.addr %s200, 4
      %s202 = scalar_lea.vmem %s4, %s201
      %p203 = scmp.lt.s32.totalorder %s19, 1
      %s204 = scalar_select %p203, %s19, 1
      %s205 = smul.addr %s204, 36
      %s206 = smul.addr %s205, 4
      %s207 = scalar_lea.vmem %s0, %s206
      %s208 = sadd.s32 %s19, %s20
      %p209 = scmp.lt.s32.totalorder %s208, 1
      %s210 = scalar_select %p209, %s208, 1
      %s211 = smul.addr %s210, 32
      %s212 = smul.addr %s211, 4
      %s213 = scalar_lea.vmem %s4, %s212
      %s214 = sadd.s32 %s19, %s20
      %s216 = smul.u32 %s20, 16
      %s217 = smul.u32 %s216, 2
      %s218 = smul.addr %s217, 4
      %s219 = scalar_lea.vmem %s207, %s218
      %v220 = vld [vmem:[%s219] sm:$0xf]
      %v221 = vld [vmem:[%s219 + $0x4] sm:$0xf]
      %v222 = vld [vmem:[%s219 + $0x8] sm:$0xf]
      %v223 = vld [vmem:[%s219 + $0xc] sm:$0xf]
      %v224 = vld [vmem:[%s219 + $0x10] sm:$0xf]
      %v225 = vld [vmem:[%s219 + $0x14] sm:$0xf]
      %v226 = vld [vmem:[%s219 + $0x18] sm:$0xf]
      %v227 = vld [vmem:[%s219 + $0x1c] sm:$0xf]
      %v228 = vld [vmem:[%s219 + $0x20] sm:$0xf]
      %v229 = vld [vmem:[%s219 + $0x24] sm:$0xf]
      %v230 = vld [vmem:[%s219 + $0x28] sm:$0xf]
      %v231 = vld [vmem:[%s219 + $0x2c] sm:$0xf]
      %v232 = vld [vmem:[%s219 + $0x30] sm:$0xf]
      %v233 = vld [vmem:[%s219 + $0x34] sm:$0xf]
      %v234 = vld [vmem:[%s219 + $0x38] sm:$0xf]
      %v235 = vld [vmem:[%s219 + $0x3c] sm:$0xf]
      %v236 = vld [vmem:[%s219 + $0x40] sm:$0xf]
      %v237 = vld [vmem:[%s219 + $0x44] sm:$0xf]
      %v238 = vld [vmem:[%s219 + $0x48] sm:$0xf]
      %v239 = vld [vmem:[%s219 + $0x4c] sm:$0xf]
      %v240 = vld [vmem:[%s219 + $0x50] sm:$0xf]
      %v241 = vld [vmem:[%s219 + $0x54] sm:$0xf]
      %v242 = vld [vmem:[%s219 + $0x58] sm:$0xf]
      %v243 = vld [vmem:[%s219 + $0x5c] sm:$0xf]
      %v244 = vld [vmem:[%s219 + $0x60] sm:$0xf]
      %v245 = vld [vmem:[%s219 + $0x64] sm:$0xf]
      %v246 = vld [vmem:[%s219 + $0x68] sm:$0xf]
      %v247 = vld [vmem:[%s219 + $0x6c] sm:$0xf]
      %v248 = vld [vmem:[%s219 + $0x70] sm:$0xf]
      %v249 = vld [vmem:[%s219 + $0x74] sm:$0xf]
      %v250 = vld [vmem:[%s219 + $0x78] sm:$0xf]
      %v251 = vld [vmem:[%s219 + $0x7c] sm:$0xf]
      %vm252 = vcmask 93184
      %253 = vst.msk [vmem:[#allocation2] sm:$0xf] %vm252, %v220
      %254 = vst.msk [vmem:[#allocation2 + $0x4] sm:$0xf] %vm252, %v221
      %255 = vst.msk [vmem:[#allocation2 + $0x8] sm:$0xf] %vm252, %v222
      %256 = vst.msk [vmem:[#allocation2 + $0xc] sm:$0xf] %vm252, %v223
      %257 = vst.msk [vmem:[#allocation2 + $0x10] sm:$0xf] %vm252, %v224
      %258 = vst.msk [vmem:[#allocation2 + $0x14] sm:$0xf] %vm252, %v225
      %259 = vst.msk [vmem:[#allocation2 + $0x18] sm:$0xf] %vm252, %v226
      %260 = vst.msk [vmem:[#allocation2 + $0x1c] sm:$0xf] %vm252, %v227
      %261 = vst.msk [vmem:[#allocation2 + $0x20] sm:$0xf] %vm252, %v228
      %262 = vst.msk [vmem:[#allocation2 + $0x24] sm:$0xf] %vm252, %v229
      %263 = vst.msk [vmem:[#allocation2 + $0x28] sm:$0xf] %vm252, %v230
      %264 = vst.msk [vmem:[#allocation2 + $0x2c] sm:$0xf] %vm252, %v231
      %265 = vst.msk [vmem:[#allocation2 + $0x30] sm:$0xf] %vm252, %v232
      %266 = vst.msk [vmem:[#allocation2 + $0x34] sm:$0xf] %vm252, %v233
      %267 = vst.msk [vmem:[#allocation2 + $0x38] sm:$0xf] %vm252, %v234
      %268 = vst.msk [vmem:[#allocation2 + $0x3c] sm:$0xf] %vm252, %v235
      %269 = vst.msk [vmem:[#allocation2 + $0x40] sm:$0xf] %vm252, %v236
      %270 = vst.msk [vmem:[#allocation2 + $0x44] sm:$0xf] %vm252, %v237
      %271 = vst.msk [vmem:[#allocation2 + $0x48] sm:$0xf] %vm252, %v238
      %272 = vst.msk [vmem:[#allocation2 + $0x4c] sm:$0xf] %vm252, %v239
      %273 = vst.msk [vmem:[#allocation2 + $0x50] sm:$0xf] %vm252, %v240
      %274 = vst.msk [vmem:[#allocation2 + $0x54] sm:$0xf] %vm252, %v241
      %275 = vst.msk [vmem:[#allocation2 + $0x58] sm:$0xf] %vm252, %v242
      %276 = vst.msk [vmem:[#allocation2 + $0x5c] sm:$0xf] %vm252, %v243
      %277 = vst.msk [vmem:[#allocation2 + $0x60] sm:$0xf] %vm252, %v244
      %278 = vst.msk [vmem:[#allocation2 + $0x64] sm:$0xf] %vm252, %v245
      %279 = vst.msk [vmem:[#allocation2 + $0x68] sm:$0xf] %vm252, %v246
      %280 = vst.msk [vmem:[#allocation2 + $0x6c] sm:$0xf] %vm252, %v247
      %281 = vst.msk [vmem:[#allocation2 + $0x70] sm:$0xf] %vm252, %v248
      %282 = vst.msk [vmem:[#allocation2 + $0x74] sm:$0xf] %vm252, %v249
      %283 = vst.msk [vmem:[#allocation2 + $0x78] sm:$0xf] %vm252, %v250
      %284 = vst.msk [vmem:[#allocation2 + $0x7c] sm:$0xf] %vm252, %v251
      %s285 = sadd.s32 %s216, 1
      %s286 = smul.u32 %s285, 2
      %s287 = smul.addr %s286, 4
      %s288 = scalar_lea.vmem %s207, %s287
      %v289 = vld [vmem:[%s288] sm:$0xf]
      %v290 = vld [vmem:[%s288 + $0x4] sm:$0xf]
      %v291 = vld [vmem:[%s288 + $0x8] sm:$0xf]
      %v292 = vld [vmem:[%s288 + $0xc] sm:$0xf]
      %v293 = vld [vmem:[%s288 + $0x10] sm:$0xf]
      %v294 = vld [vmem:[%s288 + $0x14] sm:$0xf]
      %v295 = vld [vmem:[%s288 + $0x18] sm:$0xf]
      %v296 = vld [vmem:[%s288 + $0x1c] sm:$0xf]
      %v297 = vld [vmem:[%s288 + $0x20] sm:$0xf]
      %v298 = vld [vmem:[%s288 + $0x24] sm:$0xf]
      %v299 = vld [vmem:[%s288 + $0x28] sm:$0xf]
      %v300 = vld [vmem:[%s288 + $0x2c] sm:$0xf]
      %v301 = vld [vmem:[%s288 + $0x30] sm:$0xf]
      %v302 = vld [vmem:[%s288 + $0x34] sm:$0xf]
      %v303 = vld [vmem:[%s288 + $0x38] sm:$0xf]
      %v304 = vld [vmem:[%s288 + $0x3c] sm:$0xf]
      %v305 = vld [vmem:[%s288 + $0x40] sm:$0xf]
      %v306 = vld [vmem:[%s288 + $0x44] sm:$0xf]
      %v307 = vld [vmem:[%s288 + $0x48] sm:$0xf]
      %v308 = vld [vmem:[%s288 + $0x4c] sm:$0xf]
      %v309 = vld [vmem:[%s288 + $0x50] sm:$0xf]
      %v310 = vld [vmem:[%s288 + $0x54] sm:$0xf]
      %v311 = vld [vmem:[%s288 + $0x58] sm:$0xf]
      %v312 = vld [vmem:[%s288 + $0x5c] sm:$0xf]
      %v313 = vld [vmem:[%s288 + $0x60] sm:$0xf]
      %v314 = vld [vmem:[%s288 + $0x64] sm:$0xf]
      %v315 = vld [vmem:[%s288 + $0x68] sm:$0xf]
      %v316 = vld [vmem:[%s288 + $0x6c] sm:$0xf]
      %v317 = vld [vmem:[%s288 + $0x70] sm:$0xf]
      %v318 = vld [vmem:[%s288 + $0x74] sm:$0xf]
      %v319 = vld [vmem:[%s288 + $0x78] sm:$0xf]
      %v320 = vld [vmem:[%s288 + $0x7c] sm:$0xf]
      %353 = vrot.lane.b32.xlu0 %v289, 12
      %v354 = vpop.permute.xlu0 %353
      %355 = vrot.lane.b32.xlu0 %v290, 12
      %v356 = vpop.permute.xlu0 %355
      %357 = vrot.lane.b32.xlu0 %v291, 12
      %v358 = vpop.permute.xlu0 %357
      %359 = vrot.lane.b32.xlu0 %v292, 12
      %v360 = vpop.permute.xlu0 %359
      %361 = vrot.lane.b32.xlu0 %v293, 12
      %v362 = vpop.permute.xlu0 %361
      %363 = vrot.lane.b32.xlu0 %v294, 12
      %v364 = vpop.permute.xlu0 %363
      %365 = vrot.lane.b32.xlu0 %v295, 12
      %v366 = vpop.permute.xlu0 %365
      %367 = vrot.lane.b32.xlu0 %v296, 12
      %v368 = vpop.permute.xlu0 %367
      %369 = vrot.lane.b32.xlu0 %v297, 12
      %v370 = vpop.permute.xlu0 %369
      %371 = vrot.lane.b32.xlu0 %v298, 12
      %v372 = vpop.permute.xlu0 %371
      %373 = vrot.lane.b32.xlu0 %v299, 12
      %v374 = vpop.permute.xlu0 %373
      %375 = vrot.lane.b32.xlu0 %v300, 12
      %v376 = vpop.permute.xlu0 %375
      %377 = vrot.lane.b32.xlu0 %v301, 12
      %v378 = vpop.permute.xlu0 %377
      %379 = vrot.lane.b32.xlu0 %v302, 12
      %v380 = vpop.permute.xlu0 %379
      %381 = vrot.lane.b32.xlu0 %v303, 12
      %v382 = vpop.permute.xlu0 %381
      %383 = vrot.lane.b32.xlu0 %v304, 12
      %v384 = vpop.permute.xlu0 %383
      %385 = vrot.lane.b32.xlu0 %v305, 12
      %v386 = vpop.permute.xlu0 %385
      %387 = vrot.lane.b32.xlu0 %v306, 12
      %v388 = vpop.permute.xlu0 %387
      %389 = vrot.lane.b32.xlu0 %v307, 12
      %v390 = vpop.permute.xlu0 %389
      %391 = vrot.lane.b32.xlu0 %v308, 12
      %v392 = vpop.permute.xlu0 %391
      %393 = vrot.lane.b32.xlu0 %v309, 12
      %v394 = vpop.permute.xlu0 %393
      %395 = vrot.lane.b32.xlu0 %v310, 12
      %v396 = vpop.permute.xlu0 %395
      %397 = vrot.lane.b32.xlu0 %v311, 12
      %v398 = vpop.permute.xlu0 %397
      %399 = vrot.lane.b32.xlu0 %v312, 12
      %v400 = vpop.permute.xlu0 %399
      %401 = vrot.lane.b32.xlu0 %v313, 12
      %v402 = vpop.permute.xlu0 %401
      %403 = vrot.lane.b32.xlu0 %v314, 12
      %v404 = vpop.permute.xlu0 %403
      %405 = vrot.lane.b32.xlu0 %v315, 12
      %v406 = vpop.permute.xlu0 %405
      %407 = vrot.lane.b32.xlu0 %v316, 12
      %v408 = vpop.permute.xlu0 %407
      %409 = vrot.lane.b32.xlu0 %v317, 12
      %v410 = vpop.permute.xlu0 %409
      %411 = vrot.lane.b32.xlu0 %v318, 12
      %v412 = vpop.permute.xlu0 %411
      %413 = vrot.lane.b32.xlu0 %v319, 12
      %v414 = vpop.permute.xlu0 %413
      %415 = vrot.lane.b32.xlu0 %v320, 12
      %v416 = vpop.permute.xlu0 %415
      %vm449 = vcmask 191584
      %450 = vst.msk [vmem:[#allocation2] sm:$0xf] %vm449, %v354
      %451 = vst.msk [vmem:[#allocation2 + $0x4] sm:$0xf] %vm449, %v356
      %452 = vst.msk [vmem:[#allocation2 + $0x8] sm:$0xf] %vm449, %v358
      %453 = vst.msk [vmem:[#allocation2 + $0xc] sm:$0xf] %vm449, %v360
      %454 = vst.msk [vmem:[#allocation2 + $0x10] sm:$0xf] %vm449, %v362
      %455 = vst.msk [vmem:[#allocation2 + $0x14] sm:$0xf] %vm449, %v364
      %456 = vst.msk [vmem:[#allocation2 + $0x18] sm:$0xf] %vm449, %v366
      %457 = vst.msk [vmem:[#allocation2 + $0x1c] sm:$0xf] %vm449, %v368
      %458 = vst.msk [vmem:[#allocation2 + $0x20] sm:$0xf] %vm449, %v370
      %459 = vst.msk [vmem:[#allocation2 + $0x24] sm:$0xf] %vm449, %v372
      %460 = vst.msk [vmem:[#allocation2 + $0x28] sm:$0xf] %vm449, %v374
      %461 = vst.msk [vmem:[#allocation2 + $0x2c] sm:$0xf] %vm449, %v376
      %462 = vst.msk [vmem:[#allocation2 + $0x30] sm:$0xf] %vm449, %v378
      %463 = vst.msk [vmem:[#allocation2 + $0x34] sm:$0xf] %vm449, %v380
      %464 = vst.msk [vmem:[#allocation2 + $0x38] sm:$0xf] %vm449, %v382
      %465 = vst.msk [vmem:[#allocation2 + $0x3c] sm:$0xf] %vm449, %v384
      %466 = vst.msk [vmem:[#allocation2 + $0x40] sm:$0xf] %vm449, %v386
      %467 = vst.msk [vmem:[#allocation2 + $0x44] sm:$0xf] %vm449, %v388
      %468 = vst.msk [vmem:[#allocation2 + $0x48] sm:$0xf] %vm449, %v390
      %469 = vst.msk [vmem:[#allocation2 + $0x4c] sm:$0xf] %vm449, %v392
      %470 = vst.msk [vmem:[#allocation2 + $0x50] sm:$0xf] %vm449, %v394
      %471 = vst.msk [vmem:[#allocation2 + $0x54] sm:$0xf] %vm449, %v396
      %472 = vst.msk [vmem:[#allocation2 + $0x58] sm:$0xf] %vm449, %v398
      %473 = vst.msk [vmem:[#allocation2 + $0x5c] sm:$0xf] %vm449, %v400
      %474 = vst.msk [vmem:[#allocation2 + $0x60] sm:$0xf] %vm449, %v402
      %475 = vst.msk [vmem:[#allocation2 + $0x64] sm:$0xf] %vm449, %v404
      %476 = vst.msk [vmem:[#allocation2 + $0x68] sm:$0xf] %vm449, %v406
      %477 = vst.msk [vmem:[#allocation2 + $0x6c] sm:$0xf] %vm449, %v408
      %478 = vst.msk [vmem:[#allocation2 + $0x70] sm:$0xf] %vm449, %v410
      %479 = vst.msk [vmem:[#allocation2 + $0x74] sm:$0xf] %vm449, %v412
      %480 = vst.msk [vmem:[#allocation2 + $0x78] sm:$0xf] %vm449, %v414
      %481 = vst.msk [vmem:[#allocation2 + $0x7c] sm:$0xf] %vm449, %v416
      %s482 = sadd.s32 %s216, 2
      %s483 = smul.u32 %s482, 2
      %s484 = smul.addr %s483, 4
      %s485 = scalar_lea.vmem %s207, %s484
      %v486 = vld [vmem:[%s485] sm:$0xf]
      %v487 = vld [vmem:[%s485 + $0x4] sm:$0xf]
      %v488 = vld [vmem:[%s485 + $0x8] sm:$0xf]
      %v489 = vld [vmem:[%s485 + $0xc] sm:$0xf]
      %v490 = vld [vmem:[%s485 + $0x10] sm:$0xf]
      %v491 = vld [vmem:[%s485 + $0x14] sm:$0xf]
      %v492 = vld [vmem:[%s485 + $0x18] sm:$0xf]
      %v493 = vld [vmem:[%s485 + $0x1c] sm:$0xf]
      %v494 = vld [vmem:[%s485 + $0x20] sm:$0xf]
      %v495 = vld [vmem:[%s485 + $0x24] sm:$0xf]
      %v496 = vld [vmem:[%s485 + $0x28] sm:$0xf]
      %v497 = vld [vmem:[%s485 + $0x2c] sm:$0xf]
      %v498 = vld [vmem:[%s485 + $0x30] sm:$0xf]
      %v499 = vld [vmem:[%s485 + $0x34] sm:$0xf]
      %v500 = vld [vmem:[%s485 + $0x38] sm:$0xf]
      %v501 = vld [vmem:[%s485 + $0x3c] sm:$0xf]
      %v502 = vld [vmem:[%s485 + $0x40] sm:$0xf]
      %v503 = vld [vmem:[%s485 + $0x44] sm:$0xf]
      %v504 = vld [vmem:[%s485 + $0x48] sm:$0xf]
      %v505 = vld [vmem:[%s485 + $0x4c] sm:$0xf]
      %v506 = vld [vmem:[%s485 + $0x50] sm:$0xf]
      %v507 = vld [vmem:[%s485 + $0x54] sm:$0xf]
      %v508 = vld [vmem:[%s485 + $0x58] sm:$0xf]
      %v509 = vld [vmem:[%s485 + $0x5c] sm:$0xf]
      %v510 = vld [vmem:[%s485 + $0x60] sm:$0xf]
      %v511 = vld [vmem:[%s485 + $0x64] sm:$0xf]
      %v512 = vld [vmem:[%s485 + $0x68] sm:$0xf]
      %v513 = vld [vmem:[%s485 + $0x6c] sm:$0xf]
      %v514 = vld [vmem:[%s485 + $0x70] sm:$0xf]
      %v515 = vld [vmem:[%s485 + $0x74] sm:$0xf]
      %v516 = vld [vmem:[%s485 + $0x78] sm:$0xf]
      %v517 = vld [vmem:[%s485 + $0x7c] sm:$0xf]
      %550 = vrot.lane.b32.xlu0 %v486, 24
      %v551 = vpop.permute.xlu0 %550
      %552 = vrot.lane.b32.xlu0 %v487, 24
      %v553 = vpop.permute.xlu0 %552
      %554 = vrot.lane.b32.xlu0 %v488, 24
      %v555 = vpop.permute.xlu0 %554
      %556 = vrot.lane.b32.xlu0 %v489, 24
      %v557 = vpop.permute.xlu0 %556
      %558 = vrot.lane.b32.xlu0 %v490, 24
      %v559 = vpop.permute.xlu0 %558
      %560 = vrot.lane.b32.xlu0 %v491, 24
      %v561 = vpop.permute.xlu0 %560
      %562 = vrot.lane.b32.xlu0 %v492, 24
      %v563 = vpop.permute.xlu0 %562
      %564 = vrot.lane.b32.xlu0 %v493, 24
      %v565 = vpop.permute.xlu0 %564
      %566 = vrot.lane.b32.xlu0 %v494, 24
      %v567 = vpop.permute.xlu0 %566
      %568 = vrot.lane.b32.xlu0 %v495, 24
      %v569 = vpop.permute.xlu0 %568
      %570 = vrot.lane.b32.xlu0 %v496, 24
      %v571 = vpop.permute.xlu0 %570
      %572 = vrot.lane.b32.xlu0 %v497, 24
      %v573 = vpop.permute.xlu0 %572
      %574 = vrot.lane.b32.xlu0 %v498, 24
      %v575 = vpop.permute.xlu0 %574
      %576 = vrot.lane.b32.xlu0 %v499, 24
      %v577 = vpop.permute.xlu0 %576
      %578 = vrot.lane.b32.xlu0 %v500, 24
      %v579 = vpop.permute.xlu0 %578
      %580 = vrot.lane.b32.xlu0 %v501, 24
      %v581 = vpop.permute.xlu0 %580
      %582 = vrot.lane.b32.xlu0 %v502, 24
      %v583 = vpop.permute.xlu0 %582
      %584 = vrot.lane.b32.xlu0 %v503, 24
      %v585 = vpop.permute.xlu0 %584
      %586 = vrot.lane.b32.xlu0 %v504, 24
      %v587 = vpop.permute.xlu0 %586
      %588 = vrot.lane.b32.xlu0 %v505, 24
      %v589 = vpop.permute.xlu0 %588
      %590 = vrot.lane.b32.xlu0 %v506, 24
      %v591 = vpop.permute.xlu0 %590
      %592 = vrot.lane.b32.xlu0 %v507, 24
      %v593 = vpop.permute.xlu0 %592
      %594 = vrot.lane.b32.xlu0 %v508, 24
      %v595 = vpop.permute.xlu0 %594
      %596 = vrot.lane.b32.xlu0 %v509, 24
      %v597 = vpop.permute.xlu0 %596
      %598 = vrot.lane.b32.xlu0 %v510, 24
      %v599 = vpop.permute.xlu0 %598
      %600 = vrot.lane.b32.xlu0 %v511, 24
      %v601 = vpop.permute.xlu0 %600
      %602 = vrot.lane.b32.xlu0 %v512, 24
      %v603 = vpop.permute.xlu0 %602
      %604 = vrot.lane.b32.xlu0 %v513, 24
      %v605 = vpop.permute.xlu0 %604
      %606 = vrot.lane.b32.xlu0 %v514, 24
      %v607 = vpop.permute.xlu0 %606
      %608 = vrot.lane.b32.xlu0 %v515, 24
      %v609 = vpop.permute.xlu0 %608
      %610 = vrot.lane.b32.xlu0 %v516, 24
      %v611 = vpop.permute.xlu0 %610
      %612 = vrot.lane.b32.xlu0 %v517, 24
      %v613 = vpop.permute.xlu0 %612
      %vm646 = vcmask 289984
      %647 = vst.msk [vmem:[#allocation2] sm:$0xf] %vm646, %v551
      %648 = vst.msk [vmem:[#allocation2 + $0x4] sm:$0xf] %vm646, %v553
      %649 = vst.msk [vmem:[#allocation2 + $0x8] sm:$0xf] %vm646, %v555
      %650 = vst.msk [vmem:[#allocation2 + $0xc] sm:$0xf] %vm646, %v557
      %651 = vst.msk [vmem:[#allocation2 + $0x10] sm:$0xf] %vm646, %v559
      %652 = vst.msk [vmem:[#allocation2 + $0x14] sm:$0xf] %vm646, %v561
      %653 = vst.msk [vmem:[#allocation2 + $0x18] sm:$0xf] %vm646, %v563
      %654 = vst.msk [vmem:[#allocation2 + $0x1c] sm:$0xf] %vm646, %v565
      %655 = vst.msk [vmem:[#allocation2 + $0x20] sm:$0xf] %vm646, %v567
      %656 = vst.msk [vmem:[#allocation2 + $0x24] sm:$0xf] %vm646, %v569
      %657 = vst.msk [vmem:[#allocation2 + $0x28] sm:$0xf] %vm646, %v571
      %658 = vst.msk [vmem:[#allocation2 + $0x2c] sm:$0xf] %vm646, %v573
      %659 = vst.msk [vmem:[#allocation2 + $0x30] sm:$0xf] %vm646, %v575
      %660 = vst.msk [vmem:[#allocation2 + $0x34] sm:$0xf] %vm646, %v577
      %661 = vst.msk [vmem:[#allocation2 + $0x38] sm:$0xf] %vm646, %v579
      %662 = vst.msk [vmem:[#allocation2 + $0x3c] sm:$0xf] %vm646, %v581
      %663 = vst.msk [vmem:[#allocation2 + $0x40] sm:$0xf] %vm646, %v583
      %664 = vst.msk [vmem:[#allocation2 + $0x44] sm:$0xf] %vm646, %v585
      %665 = vst.msk [vmem:[#allocation2 + $0x48] sm:$0xf] %vm646, %v587
      %666 = vst.msk [vmem:[#allocation2 + $0x4c] sm:$0xf] %vm646, %v589
      %667 = vst.msk [vmem:[#allocation2 + $0x50] sm:$0xf] %vm646, %v591
      %668 = vst.msk [vmem:[#allocation2 + $0x54] sm:$0xf] %vm646, %v593
      %669 = vst.msk [vmem:[#allocation2 + $0x58] sm:$0xf] %vm646, %v595
      %670 = vst.msk [vmem:[#allocation2 + $0x5c] sm:$0xf] %vm646, %v597
      %671 = vst.msk [vmem:[#allocation2 + $0x60] sm:$0xf] %vm646, %v599
      %672 = vst.msk [vmem:[#allocation2 + $0x64] sm:$0xf] %vm646, %v601
      %673 = vst.msk [vmem:[#allocation2 + $0x68] sm:$0xf] %vm646, %v603
      %674 = vst.msk [vmem:[#allocation2 + $0x6c] sm:$0xf] %vm646, %v605
      %675 = vst.msk [vmem:[#allocation2 + $0x70] sm:$0xf] %vm646, %v607
      %676 = vst.msk [vmem:[#allocation2 + $0x74] sm:$0xf] %vm646, %v609
      %677 = vst.msk [vmem:[#allocation2 + $0x78] sm:$0xf] %vm646, %v611
      %678 = vst.msk [vmem:[#allocation2 + $0x7c] sm:$0xf] %vm646, %v613
      %v679 = vld [vmem:[%s1] sm:$0xf]
      %v680 = vld [vmem:[%s1 + $0x4] sm:$0xf]
      %v681 = vld [vmem:[%s1 + $0x8] sm:$0xf]
      %v682 = vld [vmem:[%s1 + $0xc] sm:$0xf]
      %v683 = vld [vmem:[%s1 + $0x10] sm:$0x3]
      %v684 = vld [vmem:[%s2] sm:$0x1]
      %v685 = vld [vmem:[%s3] sm:$0x1]
      %v686 = vld [vmem:[#allocation2] sm:$0xf]
      %v687 = vld [vmem:[#allocation2 + $0x4] sm:$0xf]
      %v688 = vld [vmem:[#allocation2 + $0x8] sm:$0xf]
      %v689 = vld [vmem:[#allocation2 + $0xc] sm:$0xf]
      %v690 = vld [vmem:[#allocation2 + $0x10] sm:$0xf]
      %v691 = vld [vmem:[#allocation2 + $0x14] sm:$0xf]
      %v692 = vld [vmem:[#allocation2 + $0x18] sm:$0xf]
      %v693 = vld [vmem:[#allocation2 + $0x1c] sm:$0xf]
      %v694 = vld [vmem:[#allocation2 + $0x20] sm:$0xf]
      %v695 = vld [vmem:[#allocation2 + $0x24] sm:$0xf]
      %v696 = vld [vmem:[#allocation2 + $0x28] sm:$0xf]
      %v697 = vld [vmem:[#allocation2 + $0x2c] sm:$0xf]
      %v698 = vld [vmem:[#allocation2 + $0x30] sm:$0xf]
      %v699 = vld [vmem:[#allocation2 + $0x34] sm:$0xf]
      %v700 = vld [vmem:[#allocation2 + $0x38] sm:$0xf]
      %v701 = vld [vmem:[#allocation2 + $0x3c] sm:$0xf]
      %v718 = vunpack.c.l.b16 %v686
      %v719 = vunpack.c.l.b16 %v687
      %v720 = vunpack.c.l.b16 %v688
      %v721 = vunpack.c.l.b16 %v689
      %v722 = vunpack.c.l.b16 %v690
      %v723 = vunpack.c.l.b16 %v691
      %v724 = vunpack.c.l.b16 %v692
      %v725 = vunpack.c.l.b16 %v693
      %v726 = vunpack.c.l.b16 %v694
      %v727 = vunpack.c.l.b16 %v695
      %v728 = vunpack.c.l.b16 %v696
      %v729 = vunpack.c.l.b16 %v697
      %v730 = vunpack.c.l.b16 %v698
      %v731 = vunpack.c.l.b16 %v699
      %v732 = vunpack.c.l.b16 %v700
      %v733 = vunpack.c.l.b16 %v701
      %v734 = vpack.c.b16 %v719, %v718
      %v735 = vpack.c.b16 %v721, %v720
      %v736 = vpack.c.b16 %v723, %v722
      %v737 = vpack.c.b16 %v725, %v724
      %v738 = vpack.c.b16 %v727, %v726
      %v739 = vpack.c.b16 %v729, %v728
      %v740 = vpack.c.b16 %v731, %v730
      %v741 = vpack.c.b16 %v733, %v732
      %v747 = vunpack.c.l.b16 %v679
      %v748 = vunpack.c.l.b16 %v680
      %v749 = vunpack.c.l.b16 %v681
      %v750 = vunpack.c.l.b16 %v682
      %v751 = vunpack.c.l.b16 %v683
      %v752 = vpack.c.b16 %v748, %v747
      %v753 = vpack.c.b16 %v750, %v749
      %v754 = vpack.c.b16 %v751, %v751
      %vm757 = vcmask 293888
      %v759 = vsel %vm757, %v734, 0
      %v762 = vsel %vm757, %v735, 0
      %v765 = vsel %vm757, %v736, 0
      %v768 = vsel %vm757, %v737, 0
      %v771 = vsel %vm757, %v738, 0
      %v774 = vsel %vm757, %v739, 0
      %v777 = vsel %vm757, %v740, 0
      %v780 = vsel %vm757, %v741, 0
      %vm782 = vcmask 1041408
      %v784 = vsel %vm782, %v754, 0
      %786 = vmatpush.bf16.msra.mxu0 0
      %787 = vmatpush.bf16.msra.mxu0 0
      %788 = vmatpush.bf16.msra.mxu0 0
      %789 = vmatpush.bf16.msra.mxu0 0
      %790 = vmatpush.bf16.msra.mxu0 0
      %791 = vmatpush.bf16.msra.mxu0 %v784
      %792 = vmatpush.bf16.msra.mxu0 %v753
      %793 = vmatpush.bf16.msra.mxu0 %v752
      %794 = vmatmul.bf16.gmra.mxu0 %v759
      %v795 = vpop.f32.mrf.mxu0
      %v796 = vadd.f32 0.0, %v795
      %v797 = vpop.f32.mrf.mxu0
      %v798 = vadd.f32 0.0, %v797
      %799 = vmatmul.bf16.gmra.mxu0 %v762
      %v800 = vpop.f32.mrf.mxu0
      %v801 = vadd.f32 0.0, %v800
      %v802 = vpop.f32.mrf.mxu0
      %v803 = vadd.f32 0.0, %v802
      %804 = vmatmul.bf16.gmra.mxu0 %v765
      %v805 = vpop.f32.mrf.mxu0
      %v806 = vadd.f32 0.0, %v805
      %v807 = vpop.f32.mrf.mxu0
      %v808 = vadd.f32 0.0, %v807
      %809 = vmatmul.bf16.gmra.mxu0 %v768
      %v810 = vpop.f32.mrf.mxu0
      %v811 = vadd.f32 0.0, %v810
      %v812 = vpop.f32.mrf.mxu0
      %v813 = vadd.f32 0.0, %v812
      %814 = vmatmul.bf16.gmra.mxu0 %v771
      %v815 = vpop.f32.mrf.mxu0
      %v816 = vadd.f32 0.0, %v815
      %v817 = vpop.f32.mrf.mxu0
      %v818 = vadd.f32 0.0, %v817
      %819 = vmatmul.bf16.gmra.mxu0 %v774
      %v820 = vpop.f32.mrf.mxu0
      %v821 = vadd.f32 0.0, %v820
      %v822 = vpop.f32.mrf.mxu0
      %v823 = vadd.f32 0.0, %v822
      %824 = vmatmul.bf16.gmra.mxu0 %v777
      %v825 = vpop.f32.mrf.mxu0
      %v826 = vadd.f32 0.0, %v825
      %v827 = vpop.f32.mrf.mxu0
      %v828 = vadd.f32 0.0, %v827
      %829 = vmatmul.bf16.gmra.mxu0 %v780
      %v830 = vpop.f32.mrf.mxu0
      %v831 = vadd.f32 0.0, %v830
      %v832 = vpop.f32.mrf.mxu0
      %v833 = vadd.f32 0.0, %v832
      %834 = vdwg.mxu0
      %v836 = vperm.slane %v684, 0
      %v838 = vmul.f32 %v796, %v836
      %v839 = vmul.f32 %v798, %v836
      %v840 = vmul.f32 %v801, %v836
      %v841 = vmul.f32 %v803, %v836
      %v842 = vmul.f32 %v806, %v836
      %v843 = vmul.f32 %v808, %v836
      %v844 = vmul.f32 %v811, %v836
      %v845 = vmul.f32 %v813, %v836
      %v846 = vmul.f32 %v816, %v836
      %v847 = vmul.f32 %v818, %v836
      %v848 = vmul.f32 %v821, %v836
      %v849 = vmul.f32 %v823, %v836
      %v850 = vmul.f32 %v826, %v836
      %v851 = vmul.f32 %v828, %v836
      %v852 = vmul.f32 %v831, %v836
      %v853 = vmul.f32 %v833, %v836
      %v855 = vperm.slane %v685, 0
      %v857 = vadd.f32 %v838, %v855
      %v858 = vadd.f32 %v839, %v855
      %v859 = vadd.f32 %v840, %v855
      %v860 = vadd.f32 %v841, %v855
      %v861 = vadd.f32 %v842, %v855
      %v862 = vadd.f32 %v843, %v855
      %v863 = vadd.f32 %v844, %v855
      %v864 = vadd.f32 %v845, %v855
      %v865 = vadd.f32 %v846, %v855
      %v866 = vadd.f32 %v847, %v855
      %v867 = vadd.f32 %v848, %v855
      %v868 = vadd.f32 %v849, %v855
      %v869 = vadd.f32 %v850, %v855
      %v870 = vadd.f32 %v851, %v855
      %v871 = vadd.f32 %v852, %v855
      %v872 = vadd.f32 %v853, %v855
      %v873 = vmax.f32 %v857, 0.0
      %v874 = vmax.f32 %v858, 0.0
      %v875 = vmax.f32 %v859, 0.0
      %v876 = vmax.f32 %v860, 0.0
      %v877 = vmax.f32 %v861, 0.0
      %v878 = vmax.f32 %v862, 0.0
      %v879 = vmax.f32 %v863, 0.0
      %v880 = vmax.f32 %v864, 0.0
      %v881 = vmax.f32 %v865, 0.0
      %v882 = vmax.f32 %v866, 0.0
      %v883 = vmax.f32 %v867, 0.0
      %v884 = vmax.f32 %v868, 0.0
      %v885 = vmax.f32 %v869, 0.0
      %v886 = vmax.f32 %v870, 0.0
      %v887 = vmax.f32 %v871, 0.0
      %v888 = vmax.f32 %v872, 0.0
      %v889 = vpack.c.bf16 %v873, %v873
      %v890 = vpack.c.bf16 %v874, %v874
      %v891 = vpack.c.bf16 %v875, %v875
      %v892 = vpack.c.bf16 %v876, %v876
      %v893 = vpack.c.bf16 %v877, %v877
      %v894 = vpack.c.bf16 %v878, %v878
      %v895 = vpack.c.bf16 %v879, %v879
      %v896 = vpack.c.bf16 %v880, %v880
      %v897 = vpack.c.bf16 %v881, %v881
      %v898 = vpack.c.bf16 %v882, %v882
      %v899 = vpack.c.bf16 %v883, %v883
      %v900 = vpack.c.bf16 %v884, %v884
      %v901 = vpack.c.bf16 %v885, %v885
      %v902 = vpack.c.bf16 %v886, %v886
      %v903 = vpack.c.bf16 %v887, %v887
      %v904 = vpack.c.bf16 %v888, %v888
      %905 = vst [vmem:[%s213] sm:$0xf] %v889
      %906 = vst [vmem:[%s213 + $0x4] sm:$0xf] %v890
      %907 = vst [vmem:[%s213 + $0x8] sm:$0xf] %v891
      %908 = vst [vmem:[%s213 + $0xc] sm:$0xf] %v892
      %909 = vst [vmem:[%s213 + $0x10] sm:$0xf] %v893
      %910 = vst [vmem:[%s213 + $0x14] sm:$0xf] %v894
      %911 = vst [vmem:[%s213 + $0x18] sm:$0xf] %v895
      %912 = vst [vmem:[%s213 + $0x1c] sm:$0xf] %v896
      %913 = vst [vmem:[%s213 + $0x20] sm:$0xf] %v897
      %914 = vst [vmem:[%s213 + $0x24] sm:$0xf] %v898
      %915 = vst [vmem:[%s213 + $0x28] sm:$0xf] %v899
      %916 = vst [vmem:[%s213 + $0x2c] sm:$0xf] %v900
      %917 = vst [vmem:[%s213 + $0x30] sm:$0xf] %v901
      %918 = vst [vmem:[%s213 + $0x34] sm:$0xf] %v902
      %919 = vst [vmem:[%s213 + $0x38] sm:$0xf] %v903
      %920 = vst [vmem:[%s213 + $0x3c] sm:$0xf] %v904
      %v921 = vld [vmem:[#allocation2 + $0x40] sm:$0xf]
      %v922 = vld [vmem:[#allocation2 + $0x44] sm:$0xf]
      %v923 = vld [vmem:[#allocation2 + $0x48] sm:$0xf]
      %v924 = vld [vmem:[#allocation2 + $0x4c] sm:$0xf]
      %v925 = vld [vmem:[#allocation2 + $0x50] sm:$0xf]
      %v926 = vld [vmem:[#allocation2 + $0x54] sm:$0xf]
      %v927 = vld [vmem:[#allocation2 + $0x58] sm:$0xf]
      %v928 = vld [vmem:[#allocation2 + $0x5c] sm:$0xf]
      %v929 = vld [vmem:[#allocation2 + $0x60] sm:$0xf]
      %v930 = vld [vmem:[#allocation2 + $0x64] sm:$0xf]
      %v931 = vld [vmem:[#allocation2 + $0x68] sm:$0xf]
      %v932 = vld [vmem:[#allocation2 + $0x6c] sm:$0xf]
      %v933 = vld [vmem:[#allocation2 + $0x70] sm:$0xf]
      %v934 = vld [vmem:[#allocation2 + $0x74] sm:$0xf]
      %v935 = vld [vmem:[#allocation2 + $0x78] sm:$0xf]
      %v936 = vld [vmem:[#allocation2 + $0x7c] sm:$0xf]
      %v953 = vunpack.c.l.b16 %v921
      %v954 = vunpack.c.l.b16 %v922
      %v955 = vunpack.c.l.b16 %v923
      %v956 = vunpack.c.l.b16 %v924
      %v957 = vunpack.c.l.b16 %v925
      %v958 = vunpack.c.l.b16 %v926
      %v959 = vunpack.c.l.b16 %v927
      %v960 = vunpack.c.l.b16 %v928
      %v961 = vunpack.c.l.b16 %v929
      %v962 = vunpack.c.l.b16 %v930
      %v963 = vunpack.c.l.b16 %v931
      %v964 = vunpack.c.l.b16 %v932
      %v965 = vunpack.c.l.b16 %v933
      %v966 = vunpack.c.l.b16 %v934
      %v967 = vunpack.c.l.b16 %v935
      %v968 = vunpack.c.l.b16 %v936
      %v969 = vpack.c.b16 %v954, %v953
      %v970 = vpack.c.b16 %v956, %v955
      %v971 = vpack.c.b16 %v958, %v957
      %v972 = vpack.c.b16 %v960, %v959
      %v973 = vpack.c.b16 %v962, %v961
      %v974 = vpack.c.b16 %v964, %v963
      %v975 = vpack.c.b16 %v966, %v965
      %v976 = vpack.c.b16 %v968, %v967
      %v978 = vsel %vm757, %v969, 0
      %v981 = vsel %vm757, %v970, 0
      %v984 = vsel %vm757, %v971, 0
      %v987 = vsel %vm757, %v972, 0
      %v990 = vsel %vm757, %v973, 0
      %v993 = vsel %vm757, %v974, 0
      %v996 = vsel %vm757, %v975, 0
      %v999 = vsel %vm757, %v976, 0
      %1001 = vmatpush.bf16.msra.mxu0 0
      %1002 = vmatpush.bf16.msra.mxu0 0
      %1003 = vmatpush.bf16.msra.mxu0 0
      %1004 = vmatpush.bf16.msra.mxu0 0
      %1005 = vmatpush.bf16.msra.mxu0 0
      %1006 = vmatpush.bf16.msra.mxu0 %v784
      %1007 = vmatpush.bf16.msra.mxu0 %v753
      %1008 = vmatpush.bf16.msra.mxu0 %v752
      %1009 = vmatmul.bf16.gmra.mxu0 %v978
      %v1010 = vpop.f32.mrf.mxu0
      %v1011 = vadd.f32 0.0, %v1010
      %v1012 = vpop.f32.mrf.mxu0
      %v1013 = vadd.f32 0.0, %v1012
      %1014 = vmatmul.bf16.gmra.mxu0 %v981
      %v1015 = vpop.f32.mrf.mxu0
      %v1016 = vadd.f32 0.0, %v1015
      %v1017 = vpop.f32.mrf.mxu0
      %v1018 = vadd.f32 0.0, %v1017
      %1019 = vmatmul.bf16.gmra.mxu0 %v984
      %v1020 = vpop.f32.mrf.mxu0
      %v1021 = vadd.f32 0.0, %v1020
      %v1022 = vpop.f32.mrf.mxu0
      %v1023 = vadd.f32 0.0, %v1022
      %1024 = vmatmul.bf16.gmra.mxu0 %v987
      %v1025 = vpop.f32.mrf.mxu0
      %v1026 = vadd.f32 0.0, %v1025
      %v1027 = vpop.f32.mrf.mxu0
      %v1028 = vadd.f32 0.0, %v1027
      %1029 = vmatmul.bf16.gmra.mxu0 %v990
      %v1030 = vpop.f32.mrf.mxu0
      %v1031 = vadd.f32 0.0, %v1030
      %v1032 = vpop.f32.mrf.mxu0
      %v1033 = vadd.f32 0.0, %v1032
      %1034 = vmatmul.bf16.gmra.mxu0 %v993
      %v1035 = vpop.f32.mrf.mxu0
      %v1036 = vadd.f32 0.0, %v1035
      %v1037 = vpop.f32.mrf.mxu0
      %v1038 = vadd.f32 0.0, %v1037
      %1039 = vmatmul.bf16.gmra.mxu0 %v996
      %v1040 = vpop.f32.mrf.mxu0
      %v1041 = vadd.f32 0.0, %v1040
      %v1042 = vpop.f32.mrf.mxu0
      %v1043 = vadd.f32 0.0, %v1042
      %1044 = vmatmul.bf16.gmra.mxu0 %v999
      %v1045 = vpop.f32.mrf.mxu0
      %v1046 = vadd.f32 0.0, %v1045
      %v1047 = vpop.f32.mrf.mxu0
      %v1048 = vadd.f32 0.0, %v1047
      %1049 = vdwg.mxu0
      %v1050 = vmul.f32 %v1011, %v836
      %v1051 = vmul.f32 %v1013, %v836
      %v1052 = vmul.f32 %v1016, %v836
      %v1053 = vmul.f32 %v1018, %v836
      %v1054 = vmul.f32 %v1021, %v836
      %v1055 = vmul.f32 %v1023, %v836
      %v1056 = vmul.f32 %v1026, %v836
      %v1057 = vmul.f32 %v1028, %v836
      %v1058 = vmul.f32 %v1031, %v836
      %v1059 = vmul.f32 %v1033, %v836
      %v1060 = vmul.f32 %v1036, %v836
      %v1061 = vmul.f32 %v1038, %v836
      %v1062 = vmul.f32 %v1041, %v836
      %v1063 = vmul.f32 %v1043, %v836
      %v1064 = vmul.f32 %v1046, %v836
      %v1065 = vmul.f32 %v1048, %v836
      %v1066 = vadd.f32 %v1050, %v855
      %v1067 = vadd.f32 %v1051, %v855
      %v1068 = vadd.f32 %v1052, %v855
      %v1069 = vadd.f32 %v1053, %v855
      %v1070 = vadd.f32 %v1054, %v855
      %v1071 = vadd.f32 %v1055, %v855
      %v1072 = vadd.f32 %v1056, %v855
      %v1073 = vadd.f32 %v1057, %v855
      %v1074 = vadd.f32 %v1058, %v855
      %v1075 = vadd.f32 %v1059, %v855
      %v1076 = vadd.f32 %v1060, %v855
      %v1077 = vadd.f32 %v1061, %v855
      %v1078 = vadd.f32 %v1062, %v855
      %v1079 = vadd.f32 %v1063, %v855
      %v1080 = vadd.f32 %v1064, %v855
      %v1081 = vadd.f32 %v1065, %v855
      %v1082 = vmax.f32 %v1066, 0.0
      %v1083 = vmax.f32 %v1067, 0.0
      %v1084 = vmax.f32 %v1068, 0.0
      %v1085 = vmax.f32 %v1069, 0.0
      %v1086 = vmax.f32 %v1070, 0.0
      %v1087 = vmax.f32 %v1071, 0.0
      %v1088 = vmax.f32 %v1072, 0.0
      %v1089 = vmax.f32 %v1073, 0.0
      %v1090 = vmax.f32 %v1074, 0.0
      %v1091 = vmax.f32 %v1075, 0.0
      %v1092 = vmax.f32 %v1076, 0.0
      %v1093 = vmax.f32 %v1077, 0.0
      %v1094 = vmax.f32 %v1078, 0.0
      %v1095 = vmax.f32 %v1079, 0.0
      %v1096 = vmax.f32 %v1080, 0.0
      %v1097 = vmax.f32 %v1081, 0.0
      %v1098 = vpack.c.bf16 %v1082, %v1082
      %v1099 = vpack.c.bf16 %v1083, %v1083
      %v1100 = vpack.c.bf16 %v1084, %v1084
      %v1101 = vpack.c.bf16 %v1085, %v1085
      %v1102 = vpack.c.bf16 %v1086, %v1086
      %v1103 = vpack.c.bf16 %v1087, %v1087
      %v1104 = vpack.c.bf16 %v1088, %v1088
      %v1105 = vpack.c.bf16 %v1089, %v1089
      %v1106 = vpack.c.bf16 %v1090, %v1090
      %v1107 = vpack.c.bf16 %v1091, %v1091
      %v1108 = vpack.c.bf16 %v1092, %v1092
      %v1109 = vpack.c.bf16 %v1093, %v1093
      %v1110 = vpack.c.bf16 %v1094, %v1094
      %v1111 = vpack.c.bf16 %v1095, %v1095
      %v1112 = vpack.c.bf16 %v1096, %v1096
      %v1113 = vpack.c.bf16 %v1097, %v1097
      %1114 = vst [vmem:[%s213 + $0x40] sm:$0xf] %v1098
      %1115 = vst [vmem:[%s213 + $0x44] sm:$0xf] %v1099
      %1116 = vst [vmem:[%s213 + $0x48] sm:$0xf] %v1100
      %1117 = vst [vmem:[%s213 + $0x4c] sm:$0xf] %v1101
      %1118 = vst [vmem:[%s213 + $0x50] sm:$0xf] %v1102
      %1119 = vst [vmem:[%s213 + $0x54] sm:$0xf] %v1103
      %1120 = vst [vmem:[%s213 + $0x58] sm:$0xf] %v1104
      %1121 = vst [vmem:[%s213 + $0x5c] sm:$0xf] %v1105
      %1122 = vst [vmem:[%s213 + $0x60] sm:$0xf] %v1106
      %1123 = vst [vmem:[%s213 + $0x64] sm:$0xf] %v1107
      %1124 = vst [vmem:[%s213 + $0x68] sm:$0xf] %v1108
      %1125 = vst [vmem:[%s213 + $0x6c] sm:$0xf] %v1109
      %1126 = vst [vmem:[%s213 + $0x70] sm:$0xf] %v1110
      %1127 = vst [vmem:[%s213 + $0x74] sm:$0xf] %v1111
      %1128 = vst [vmem:[%s213 + $0x78] sm:$0xf] %v1112
      %1129 = vst [vmem:[%s213 + $0x7c] sm:$0xf] %v1113
      %s1130 = sadd.s32 %s19, %s20
      %p1131 = scmp.lt.s32.totalorder %s1130, 1
      %s1132 = scalar_select %p1131, %s1130, 1
      %s1133 = smul.addr %s1132, 32
      %s1134 = smul.addr %s1133, 4
      %s1135 = scalar_lea.vmem %s4, %s1134
      // Predicated region
      $region37: #{basic_conv2d.1} parent=35 // pred_check
        %p1136 = pneg %p136
      $region38: #{basic_conv2d.1} parent=35 // pred_check_branch
        %1138 = sbr.rel (%p1136) target = $region40
      $region39: #{basic_conv2d.1} parent=35 // pred_region
        %s1139 = sadd.s32 %s19, %s20
      $region40: #{basic_conv2d.1} parent=35 // pred_fallthru
        _
    $region36: #{basic_conv2d.1} parent=5 // pred_fallthru
      _
    %p1140 = scmp.le.s32.totalorder 2, %s10
    // Predicated region
    $region41: #{basic_conv2d.1} parent=5 // pred_check
      %p1141 = pneg %p1140
    $region42: #{basic_conv2d.1} parent=5 // pred_check_branch
      %1143 = sbr.rel (%p1141) target = $region44
    $region43: #{basic_conv2d.1} parent=5 // pred_region
      %s1144 = ssub.s32 %s10, 2
      // Predicated region
      $region45: #{basic_conv2d.1} parent=43 // pred_check
        %p1145 = pneg %p142
      $region46: #{basic_conv2d.1} parent=43 // pred_check_branch
        %1147 = sbr.rel (%p1145) target = $region48
      $region47: #{basic_conv2d.1} parent=43 // pred_region
        %s1148 = sadd.s32 %s21, %s22
        %p1149 = scmp.lt.s32.totalorder %s1148, 1
        %s1150 = scalar_select %p1149, %s1148, 1
        %s1151 = smul.addr %s1150, 32
        %s1152 = smul.addr %s1151, 4
        %s1153 = scalar_lea.vmem %s4, %s1152
      $region48: #{basic_conv2d.1} parent=43 // pred_fallthru
        _
    $region44: #{basic_conv2d.1} parent=5 // pred_fallthru
      _
  $region6: #{basic_conv2d.1} parent=0 // loop_footer
    %s14 = sadd.s32 1, %s10
  $region7: #{basic_conv2d.1} parent=0 // loop_footer_branch
    %9 = sbr.rel target = $region3
  $region8: #{basic_conv2d.1} parent=0 // loop_exit
    _

</llo_original>
